<compile_context>
chip_gen: v5e
topology: v5e:2x2
jax: 0.10.0
libtpu: 0.0.40
codegen_flags: <defaults>
</compile_context>

<pallas_src>
import jax
import jax.numpy as jnp
from jax.experimental import pallas as pl
from jax.experimental.pallas import tpu as pltpu


def _round_up(x: int, m: int) -> int:
    return -(-x // m) * m


def _chomp_copy_kernel(x_ref, o_ref):
    # x_ref block: (TM, Kin) where Kin >= K (prefix read) or Kin == Kpad.
    # o_ref block: (TM, K).  Static slice; hidden under DMA time.
    k = o_ref.shape[-1]
    o_ref[...] = x_ref[:, :k]


def chomp1d(x: jax.Array, chomp_size: int, *, target_tile_bytes: int = 4 << 20) -> jax.Array:
    """Pallas equivalent of Chomp1d(chomp_size)(x) for x of shape [M, H, Kpad]."""
    M, H, Kpad = x.shape
    K = Kpad - chomp_size
    # chomp_size == 0 (identity) is not supported; PyTorch's x[..., :-0] is
    # degenerate anyway.
    assert 0 < K < Kpad, "chomp_size must be in (0, Kpad)"

    # Flatten leading dims: the chomp only touches the last axis and x is
    # contiguous, so this reshape is free and lets us build big row tiles.
    rows = M * H
    x2 = x.reshape(rows, Kpad)

    itemsize = jnp.dtype(x.dtype).itemsize
    # Packed min-tile sublane multiple: 8 for 4-byte, 16 for 2-byte, 32 for 1-byte.
    sub = max(8, 32 // itemsize)

    # ---- Input column window (prefix read) ------------------------------
    # Any 128-multiple block width is legal; only fall back to the full Kpad
    # when the prefix doesn't actually save anything, or when the strided
    # per-row run would be too short to use HBM efficiently while the tail
    # over-read is small.
    kp128 = _round_up(K, 128)
    if kp128 >= Kpad:
        kin = Kpad
    else:
        prefix_row_bytes = kp128 * itemsize
        tail_frac = (Kpad - kp128) / Kpad
        if prefix_row_bytes < 512 and tail_frac < 0.25:
            kin = Kpad  # one fully-linear DMA beats a short strided read
        else:
            kin = kp128

    # ---- Row-tile sizing by *padded* VMEM footprint ----------------------
    padded_row_bytes = _round_up(kin, 128) * itemsize
    tm = max(1, target_tile_bytes // padded_row_bytes)
    if tm >= rows:
        tm = rows
    else:
        tm = max(sub, (tm // sub) * sub)
        if tm >= rows:
            tm = rows

    # Force >= 2 grid steps when a single step would cover a tensor that is
    # large enough to matter, so both v7x TensorCores participate.
    if tm >= rows and rows >= 2 * sub:
        total_padded_in = _round_up(rows, sub) * _round_up(kin, 128) * itemsize
        if total_padded_in >= (1 << 20):
            half = -(-rows // 2)
            tm = min(rows, _round_up(half, sub))

    grid = (pl.cdiv(rows, tm),)

    # ---- Explicit scoped-VMEM budget (double-buffered in + out) ----------
    in_buf = _round_up(tm, sub) * _round_up(kin, 128) * itemsize
    out_buf = _round_up(tm, sub) * _round_up(K, 128) * itemsize
    vmem_limit = max(16 << 20, min(48 << 20, 2 * (in_buf + out_buf) + (2 << 20)))

    cost = pl.CostEstimate(
        flops=0,
        transcendentals=0,
        bytes_accessed=rows * (kin + K) * itemsize,
    )

    out2 = pl.pallas_call(
        _chomp_copy_kernel,
        out_shape=jax.ShapeDtypeStruct((rows, K), x.dtype),
        grid_spec=pltpu.PrefetchScalarGridSpec(
            num_scalar_prefetch=0,
            grid=grid,
            in_specs=[pl.BlockSpec((tm, kin), lambda i: (i, 0))],
            out_specs=pl.BlockSpec((tm, K), lambda i: (i, 0)),
        ),
        compiler_params=pltpu.CompilerParams(
            dimension_semantics=("parallel",),
            vmem_limit_bytes=int(vmem_limit),
        ),
        cost_estimate=cost,
    )(x2)

    return out2.reshape(M, H, K)


if __name__ == "__main__":
    key = jax.random.PRNGKey(0)

    # Case 1: small [M, H, Kpad] input, K = 13 (not 128-aligned, short rows)
    # -> full-Kpad linear-read path.
    M, H, Kpad = 2, 4, 16
    chomp_size = 3
    K = Kpad - chomp_size
    x = jax.random.normal(key, (M, H, Kpad), dtype=jnp.float32)
    out = jax.block_until_ready(chomp1d(x, chomp_size))
    ref = x[:, :, :-chomp_size]
    assert out.shape == (M, H, K), out.shape
    assert out.dtype == x.dtype
    assert jnp.array_equal(out, ref), "Pallas chomp output mismatch (case 1)"

    # Case 2: K = 256 (128-aligned prefix, >= 512 B per row) -> prefix-read path.
    M2, H2, Kpad2 = 2, 8, 259
    chomp2 = 3
    x2 = jax.random.normal(jax.random.PRNGKey(0), (M2, H2, Kpad2), dtype=jnp.float32)
    out2 = jax.block_until_ready(chomp1d(x2, chomp2))
    ref2 = x2[:, :, :-chomp2]
    assert out2.shape == (M2, H2, Kpad2 - chomp2), out2.shape
    assert jnp.array_equal(out2, ref2), "Pallas chomp output mismatch (case 2)"

    # Case 3: bf16 with a large chomp (K = 50 -> kin = 128 < Kpad = 200):
    # exercises the generalized (round_up(K,128)) prefix read and the
    # 16-sublane tile multiple for 2-byte dtypes.
    M3, H3, Kpad3 = 2, 16, 200
    chomp3 = 150
    x3 = jax.random.normal(jax.random.PRNGKey(0), (M3, H3, Kpad3), dtype=jnp.bfloat16)
    out3 = jax.block_until_ready(chomp1d(x3, chomp3))
    ref3 = x3[:, :, :-chomp3]
    assert out3.shape == (M3, H3, Kpad3 - chomp3), out3.shape
    assert out3.dtype == x3.dtype
    assert jnp.array_equal(out3, ref3), "Pallas chomp output mismatch (case 3)"

    print("KERNEL_OK")
</pallas_src>

<mosaic_0001>
module attributes {stable_mosaic.version = 11 : i64} {
  func.func @_chomp_copy_kernel(%arg0: i32, %arg1: memref<8x16xf32, #tpu.memory_space<vmem>>, %arg2: memref<8x13xf32, #tpu.memory_space<vmem>>) attributes {dimension_semantics = [#tpu.dimension_semantics<parallel>], iteration_bounds = array<i64: 1>, scalar_prefetch = 0 : i64, scratch_operands = 0 : i64, tpu.core_type = #tpu.core_type<tc>, window_params = [{transform_indices = @transform_0, window_bounds = array<i64: 8, 16>}, {transform_indices = @transform_1, window_bounds = array<i64: 8, 13>}]} {
    %c0 = arith.constant 0 : index
    %c0_0 = arith.constant 0 : index
    %0 = vector.load %arg1[%c0, %c0_0] : memref<8x16xf32, #tpu.memory_space<vmem>>, vector<8x13xf32>
    %c0_1 = arith.constant 0 : index
    %c0_2 = arith.constant 0 : index
    %1 = vector.load %arg2[%c0_1, %c0_2] : memref<8x13xf32, #tpu.memory_space<vmem>>, vector<8x13xf32>
    tpu.vector_store %arg2[%c0_1, %c0_2], %0 {strides = array<i32>} : memref<8x13xf32, #tpu.memory_space<vmem>>, vector<8x13xf32>,
    return
  }
  func.func @transform_0(%arg0: i32) -> (i32, i32) {
    %c0_i32 = arith.constant 0 : i32
    %c0_i32_0 = arith.constant 0 : i32
    return %arg0, %c0_i32 : i32, i32
  }
  func.func @transform_1(%arg0: i32) -> (i32, i32) {
    %c0_i32 = arith.constant 0 : i32
    %c0_i32_0 = arith.constant 0 : i32
    return %arg0, %c0_i32 : i32, i32
  }
}

</mosaic_0001>

<llo_original>
// kernel: tpu_custom_call.1
$region0: #{tpu_custom_call.1}
  #allocation0 [shape = 'u32[]', space=smem, size = 0x4, offset = 0x4, fixed_abs, tag = 'smem constant byte address 0x4 - core index']
  #allocation1 [shape = 'u32[72,128]{1,0:T(1,128)}', space=vmem, size = 0x9000, scoped, tag = 'internal scratch']
  %s0 = inlined_call_operand.hbm [shape: f32[8,16], index: 0, kind: input, shape index: {}]
  %s1 = inlined_call_operand.hbm [shape: f32[8,13], index: 1, kind: output, shape index: {}]
  %s2 = sld [smem:[#allocation0]]
  $region18: #{tpu_custom_call.1} parent=0
    _
  %s4 = ssub.s32 1, %s2
  %s5 = scalar_select 0, %s4, %s2
  $region1: #{tpu_custom_call.1} parent=0
    #allocation2 [shape = 'u8[4096]{0}', space=vmem, size = 0x1000, scoped, tag = 'input window, operand 0, single buffered']
    #allocation3 [shape = 's32[1]{0}', space=sflag, size = 0x4, scoped, tag = 'scoped memory for tpu_custom_call.1']
    #allocation4 [shape = 's32[1]{0}', space=sflag, size = 0x4, scoped, tag = 'scoped memory for tpu_custom_call.1']
    #allocation5 [shape = 'u8[4096]{0}', space=vmem, size = 0x1000, scoped, tag = 'output window, operand 0, single buffered']
    %6 = vsyncpa [#allocation3], 0
    %7 = vsyncpa [#allocation4], 0
    // Predicated region
    $region2: #{tpu_custom_call.1} parent=1 // pred_check
      _
    $region3: #{tpu_custom_call.1} parent=1 // pred_check_branch
      %9 = sbr.rel (0) target = $region5
    $region4: #{tpu_custom_call.1} parent=1 // pred_region
      %11 = vsyncadd [#allocation3], 0
      %s13 = sshll.u32 %s0, 4
      %s14 = int_to_ptr.hbm [resolvable:$true] %s13
      %s15 = sshll.u32 [#allocation2], 4
      %s16 = int_to_ptr.vmem [resolvable:$true] %s15
      %18 = dma.hbm_to_vmem [thread:$0]  %s14, 128, %s16, [#allocation3]
    $region5: #{tpu_custom_call.1} parent=1 // pred_fallthru
      _
    // Predicated region
    $region6: #{tpu_custom_call.1} parent=1 // pred_check
      _
    $region7: #{tpu_custom_call.1} parent=1 // pred_check_branch
      %20 = sbr.rel (0) target = $region9
    $region8: #{tpu_custom_call.1} parent=1 // pred_region
      %22 = dma.done [#allocation3], 128
    $region9: #{tpu_custom_call.1} parent=1 // pred_fallthru
      _
    %v23 = vld [vmem:[#allocation2] sm:$0xff]
    %vm24 = vcmask 105472
    %25 = vst.msk [vmem:[#allocation5] sm:$0xff] %vm24, %v23
    // Predicated region
    $region10: #{tpu_custom_call.1} parent=1 // pred_check
      _
    $region11: #{tpu_custom_call.1} parent=1 // pred_check_branch
      %27 = sbr.rel (0) target = $region13
    $region12: #{tpu_custom_call.1} parent=1 // pred_region
      %29 = vsyncadd [#allocation4], 0
      %s31 = sshll.u32 [#allocation5], 4
      %s32 = int_to_ptr.vmem [resolvable:$true] %s31
      %s33 = sshll.u32 %s1, 4
      %s34 = int_to_ptr.hbm [resolvable:$true] %s33
      %36 = dma.vmem_to_hbm [thread:$0]  %s32, 128, %s34, [#allocation4]
    $region13: #{tpu_custom_call.1} parent=1 // pred_fallthru
      _
    // Predicated region
    $region14: #{tpu_custom_call.1} parent=1 // pred_check
      _
    $region15: #{tpu_custom_call.1} parent=1 // pred_check_branch
      %38 = sbr.rel (0) target = $region17
    $region16: #{tpu_custom_call.1} parent=1 // pred_region
      %40 = dma.done [#allocation4], 128
    $region17: #{tpu_custom_call.1} parent=1 // pred_fallthru
      _
    %41 = vsyncpa [#allocation3], 1
    %42 = vsyncpa [#allocation4], 1

</llo_original>
